<compile_context>
chip_gen: v7x
topology: tpu7x:2x2x1
jax: 0.10.0
libtpu: 0.0.40
codegen_flags: <defaults>
</compile_context>

<pallas_src>
import math
import functools

import numpy as np
import jax
import jax.numpy as jnp
from jax.experimental import pallas as pl
from jax.experimental.pallas import tpu as pltpu


def _round_up(x, m):
    return ((x + m - 1) // m) * m


def _cdiv(a, b):
    return -(-a // b)


_DEFAULT_TILE_ROWS = 2048    # packed rows per tile (~2 MiB f32 at W=256)
_MIN_ROWS_FOR_SPLIT = 1024   # force >=2 grid steps (v7x megacore) only above this
_MAX_TILE_BYTES = 4 << 20    # per-output-buffer cap; 2x double-buffer << scoped VMEM


def _pos_embed_kernel(a_ref, b_ref, o_ref, *, tile_rows):
    """One (TR, W) lane-dense tile:  out = sin(row * a + b).

    a[c] and b[c] are host-precomputed per-column constants such that
      row * a[c] + b[c] == pos(row, c) * scale_factor / dim_t(c) + phase(c)
    with phase = pi/2 on odd features (so cos becomes sin).
    """
    i = pl.program_id(0)
    TR, W = o_ref.shape
    row = jax.lax.broadcasted_iota(jnp.int32, (TR, W), dimension=0)
    row = (row + i * tile_rows).astype(jnp.float32)
    o_ref[...] = jnp.sin(row * a_ref[...] + b_ref[...]).astype(o_ref.dtype)


def position_embedding_sine(x, *, num_pos_feats=64, temperature=10000.0,
                            normalize=False, scale=None, tile_rows=None,
                            out_dtype=jnp.float32):
    """JAX/Pallas equivalent of PositionEmbeddingSine.forward.

    Args:
      x: (B, L, d) array -- only L is used (matches the PyTorch module).
      tile_rows: optional packed-row tile size hint (rounded to sublane mult).
      out_dtype: output dtype (float32 default; bfloat16 halves HBM writes).
    Returns:
      (1, L, num_pos_feats) array of `out_dtype`.
    """
    if scale is not None and not normalize:
        raise ValueError('normalize should be True if scale is passed')
    if scale is None:
        scale = 2.0 * math.pi

    L = int(x.shape[1])
    D = int(num_pos_feats)
    out_dtype = jnp.dtype(out_dtype)

    # ---- lane packing: P consecutive positions per packed output row so the
    # written block is a multiple of 128 lanes wide (no masked partial stores).
    P = 1 if D % 128 == 0 else 128 // math.gcd(D, 128)
    W = P * D                                   # always a multiple of 128

    # sublane granularity for the output dtype (f32: 8, bf16: 16).
    sub = 16 if out_dtype.itemsize == 2 else 8

    rows = _cdiv(L, P)                          # packed rows

    # ---- tile / grid sizing --------------------------------------------
    req = _DEFAULT_TILE_ROWS if tile_rows is None else int(tile_rows)
    req = max(sub, _round_up(req, sub))
    num_tiles = _cdiv(rows, req)
    if rows >= _MIN_ROWS_FOR_SPLIT:
        # Ensure >=2 parallel grid steps so v7x's two TensorCores both work;
        # gated on rows so tiny inputs don't pay extra per-step overhead.
        num_tiles = max(num_tiles, 2)
    TR = _round_up(_cdiv(rows, num_tiles), sub)
    # Clamp so one (double-buffered) output tile stays small vs scoped VMEM.
    max_tr = max(sub, (_MAX_TILE_BYTES // (W * out_dtype.itemsize)) // sub * sub)
    TR = min(TR, max_tr)
    num_tiles = _cdiv(rows, TR)
    rows_padded = num_tiles * TR                # padding < sub rows per tile
    grid = (num_tiles,)

    # ---- host-side per-column constants (fold 1/dim_t, normalize scale,
    # packed-position offset and cos->sin(x+pi/2) phase).
    sf = (float(scale) / (float(L) + 1e-6)) if normalize else 1.0
    j = np.arange(D, dtype=np.float64)
    inv_dim_t = float(temperature) ** (-2.0 * np.floor(j / 2.0) / float(D))
    coeff = sf * inv_dim_t                                   # (D,)
    phase = np.where(j % 2 == 1, np.pi / 2.0, 0.0)           # (D,)
    p_idx = np.arange(P, dtype=np.float64)[:, None]          # (P, 1)
    a_row = np.tile(float(P) * coeff, P).reshape(1, W)
    b_row = ((p_idx + 1.0) * coeff[None, :] + phase[None, :]).reshape(1, W)
    a = jnp.asarray(a_row, dtype=jnp.float32)
    b = jnp.asarray(b_row, dtype=jnp.float32)

    kernel = functools.partial(_pos_embed_kernel, tile_rows=TR)
    const_spec = pl.BlockSpec((1, W), lambda i: (0, 0))      # resident constants

    elems = rows_padded * W
    cost = pl.CostEstimate(
        flops=5 * elems,                  # iota/add/convert/mul/add per element
        transcendentals=elems,            # one sin per element
        bytes_accessed=elems * out_dtype.itemsize + 2 * W * 4)

    out_packed = pl.pallas_call(
        kernel,
        out_shape=jax.ShapeDtypeStruct((rows_padded, W), out_dtype),
        grid=grid,
        in_specs=[const_spec, const_spec],
        out_specs=pl.BlockSpec((TR, W), lambda i: (i, 0)),
        compiler_params=pltpu.CompilerParams(
            dimension_semantics=("parallel",)),
        cost_estimate=cost,
    )(a, b)

    # unpack: (rows_padded, P*D) -> (rows_padded*P, D).  Row-major reshape is a
    # free bitcast; only slice when padding rows actually exist (fast path
    # avoids re-materializing the output).
    out = out_packed.reshape(rows_padded * P, D)
    if rows_padded * P != L:
        out = out[:L]
    # PyTorch returns a leading batch dim of 1 (from mask = ones(1, L)).
    return out[None, :, :]


def _reference(x, *, num_pos_feats=64, temperature=10000.0,
               normalize=False, scale=None):
    """Pure-JAX reference mirroring the PyTorch code, for verification."""
    if scale is None:
        scale = 2.0 * math.pi
    L = x.shape[1]
    x_embed = jnp.cumsum(jnp.ones((1, L), jnp.float32), axis=1)
    if normalize:
        eps = 1e-6
        x_embed = x_embed / (x_embed[:, -1:] + eps) * scale
    dim_t = jnp.arange(num_pos_feats, dtype=jnp.float32)
    dim_t = temperature ** (2.0 * (dim_t // 2) / num_pos_feats)
    pos_x = x_embed[:, :, None] / dim_t
    pos_x = jnp.stack(
        (jnp.sin(pos_x[:, :, 0::2]), jnp.cos(pos_x[:, :, 1::2])), axis=3
    ).reshape(1, L, num_pos_feats)
    return pos_x


if __name__ == "__main__":
    key = jax.random.PRNGKey(0)

    # Case 1: module defaults at small shapes (B=2, L=8, d=32), D=64.
    B, L, d = 2, 8, 32
    x = jax.random.normal(key, (B, L, d), dtype=jnp.float32)
    out = jax.block_until_ready(position_embedding_sine(x, num_pos_feats=64))
    ref = _reference(x, num_pos_feats=64)
    assert out.shape == (1, L, 64), out.shape
    assert jnp.allclose(out, ref, atol=1e-5, rtol=1e-5), (
        float(jnp.max(jnp.abs(out - ref))))

    # Case 2: normalize=True, odd L (exercises padding + the slice fallback)
    # and a small tile_rows override so the grid has multiple parallel steps.
    L2 = 70
    x2 = jax.random.normal(key, (B, L2, d), dtype=jnp.float32)
    out2 = jax.block_until_ready(position_embedding_sine(
        x2, num_pos_feats=64, normalize=True, tile_rows=16))
    ref2 = _reference(x2, num_pos_feats=64, normalize=True)
    assert out2.shape == (1, L2, 64), out2.shape
    assert jnp.allclose(out2, ref2, atol=1e-5, rtol=1e-5), (
        float(jnp.max(jnp.abs(out2 - ref2))))

    # Case 3: num_pos_feats already a multiple of 128 (no lane packing path,
    # exercises the no-slice fast path).
    out3 = jax.block_until_ready(position_embedding_sine(
        x, num_pos_feats=128, normalize=True))
    ref3 = _reference(x, num_pos_feats=128, normalize=True)
    assert out3.shape == (1, L, 128), out3.shape
    assert jnp.allclose(out3, ref3, atol=1e-5, rtol=1e-5), (
        float(jnp.max(jnp.abs(out3 - ref3))))

    # Case 4: larger L exercising the automatic >=2-tile split for v7x and the
    # padding-free fast path (rows_padded * P == L, so no post-kernel slice).
    L4 = 4096
    x4 = jax.random.normal(key, (1, L4, d), dtype=jnp.float32)
    out4 = jax.block_until_ready(position_embedding_sine(
        x4, num_pos_feats=64, normalize=True))
    ref4 = _reference(x4, num_pos_feats=64, normalize=True)
    assert out4.shape == (1, L4, 64), out4.shape
    assert jnp.allclose(out4, ref4, atol=2e-5, rtol=1e-5), (
        float(jnp.max(jnp.abs(out4 - ref4))))

    # Case 5: opt-in bfloat16 output (halves HBM write bytes); looser tolerance.
    L5 = 64
    x5 = jax.random.normal(key, (B, L5, d), dtype=jnp.float32)
    out5 = jax.block_until_ready(position_embedding_sine(
        x5, num_pos_feats=64, out_dtype=jnp.bfloat16))
    ref5 = _reference(x5, num_pos_feats=64)
    assert out5.shape == (1, L5, 64), out5.shape
    assert out5.dtype == jnp.bfloat16
    assert jnp.allclose(out5.astype(jnp.float32), ref5, atol=2e-2), (
        float(jnp.max(jnp.abs(out5.astype(jnp.float32) - ref5))))

    print("KERNEL_OK")
</pallas_src>

<mosaic_0001>
module attributes {stable_mosaic.version = 11 : i64} {
  func.func @_pos_embed_kernel(%arg0: i32, %arg1: memref<1x128xf32, #tpu.memory_space<vmem>>, %arg2: memref<1x128xf32, #tpu.memory_space<vmem>>, %arg3: memref<8x128xf32, #tpu.memory_space<vmem>>) attributes {dimension_semantics = [#tpu.dimension_semantics<parallel>], iteration_bounds = array<i64: 1>, scalar_prefetch = 0 : i64, scratch_operands = 0 : i64, tpu.core_type = #tpu.core_type<tc>, window_params = [{pipeline_mode = #tpu.pipeline_mode<synchronous>, transform_indices = @transform_0, window_bounds = array<i64: 1, 128>}, {pipeline_mode = #tpu.pipeline_mode<synchronous>, transform_indices = @transform_1, window_bounds = array<i64: 1, 128>}, {transform_indices = @transform_2, window_bounds = array<i64: 8, 128>}]} {
    %0 = tpu.iota {dimensions = array<i32: 0>} : vector<8x128xi32>
    %c8_i32 = arith.constant 8 : i32
    %1 = arith.muli %arg0, %c8_i32 : i32
    %2 = vector.broadcast %1 : i32 to vector<8x128xi32>
    %3 = arith.addi %0, %2 : vector<8x128xi32>
    %4 = arith.sitofp %3 : vector<8x128xi32> to vector<8x128xf32>
    %c0 = arith.constant 0 : index
    %c0_0 = arith.constant 0 : index
    %5 = vector.load %arg1[%c0, %c0_0] : memref<1x128xf32, #tpu.memory_space<vmem>>, vector<1x128xf32>
    %6 = vector.broadcast %5 : vector<1x128xf32> to vector<8x128xf32>
    %7 = arith.mulf %4, %6 : vector<8x128xf32>
    %c0_1 = arith.constant 0 : index
    %c0_2 = arith.constant 0 : index
    %8 = vector.load %arg2[%c0_1, %c0_2] : memref<1x128xf32, #tpu.memory_space<vmem>>, vector<1x128xf32>
    %9 = vector.broadcast %8 : vector<1x128xf32> to vector<8x128xf32>
    %10 = arith.addf %7, %9 : vector<8x128xf32>
    %11 = math.sin %10 : vector<8x128xf32>
    %c0_3 = arith.constant 0 : index
    %c0_4 = arith.constant 0 : index
    %12 = vector.load %arg3[%c0_3, %c0_4] : memref<8x128xf32, #tpu.memory_space<vmem>>, vector<8x128xf32>
    tpu.vector_store %arg3[%c0_3, %c0_4], %11 {strides = array<i32>} : memref<8x128xf32, #tpu.memory_space<vmem>>, vector<8x128xf32>,
    return
  }
  func.func @transform_0(%arg0: i32) -> (i32, i32) {
    %c0_i32 = arith.constant 0 : i32
    %c0_i32_0 = arith.constant 0 : i32
    %c0_i32_1 = arith.constant 0 : i32
    return %c0_i32, %c0_i32_0 : i32, i32
  }
  func.func @transform_1(%arg0: i32) -> (i32, i32) {
    %c0_i32 = arith.constant 0 : i32
    %c0_i32_0 = arith.constant 0 : i32
    %c0_i32_1 = arith.constant 0 : i32
    return %c0_i32, %c0_i32_0 : i32, i32
  }
  func.func @transform_2(%arg0: i32) -> (i32, i32) {
    %c0_i32 = arith.constant 0 : i32
    %c0_i32_0 = arith.constant 0 : i32
    return %arg0, %c0_i32 : i32, i32
  }
}

</mosaic_0001>

<llo_original>
// kernel: tpu_custom_call.1
$region0: #{tpu_custom_call.1}
  #allocation0 [shape = 'u32[]', space=smem, size = 0x4, offset = 0x4, fixed_abs, tag = 'smem constant byte address 0x4 - core index']
  #allocation1 [shape = 'u32[144,128]{1,0:T(1,128)}', space=vmem, size = 0x12000, scoped, tag = 'internal scratch']
  %s0 = inlined_call_operand.hbm [shape: f32[1,128], index: 0, kind: input, shape index: {}]
  %s1 = inlined_call_operand.vmem [shape: f32[1,128], index: 1, kind: input, shape index: {}]
  %s2 = inlined_call_operand.hbm [shape: f32[8,128], index: 2, kind: output, shape index: {}]
  %s3 = sld [smem:[#allocation0]]
  $region22: #{tpu_custom_call.1} parent=0
    _
  %s5 = ssub.s32 1, %s3
  %s6 = scalar_select 0, %s5, %s3
  $region1: #{tpu_custom_call.1} parent=0
    #allocation2 [shape = 'u8[512]{0}', space=vmem, size = 0x400, scoped, tag = 'input window, operand 0, single buffered']
    #allocation3 [shape = 's32[1]{0}', space=sflag, size = 0x4, scoped, tag = 'scoped memory for tpu_custom_call.1']
    #allocation4 [shape = 's32[1]{0}', space=sflag, size = 0x4, scoped, tag = 'scoped memory for tpu_custom_call.1']
    #allocation5 [shape = 'u8[4096]{0}', space=vmem, size = 0x1000, scoped, tag = 'output window, operand 0, single buffered']
    %7 = vsyncpa [#allocation3], 0
    %8 = vsyncpa [#allocation4], 0
    // Predicated region
    $region2: #{tpu_custom_call.1} parent=1 // pred_check
      _
    $region3: #{tpu_custom_call.1} parent=1 // pred_check_branch
      %10 = sbr.rel (0) target = $region5
    $region4: #{tpu_custom_call.1} parent=1 // pred_region
      %s12 = ssub.s32 16, 16
      %13 = vsyncadd [#allocation3], %s12
      %s15 = sshll.u32 [#allocation2], 4
      %s16 = int_to_ptr.vmem [resolvable:$true] %s15
      %18 = dma.hbm_to_vmem [thread:$0]  %s0, 16, %s16, [#allocation3]
    $region5: #{tpu_custom_call.1} parent=1 // pred_fallthru
      _
    // Predicated region
    $region6: #{tpu_custom_call.1} parent=1 // pred_check
      _
    $region7: #{tpu_custom_call.1} parent=1 // pred_check_branch
      %20 = sbr.rel (0) target = $region9
    $region8: #{tpu_custom_call.1} parent=1 // pred_region
      _
    $region9: #{tpu_custom_call.1} parent=1 // pred_fallthru
      _
    // Predicated region
    $region10: #{tpu_custom_call.1} parent=1 // pred_check
      _
    $region11: #{tpu_custom_call.1} parent=1 // pred_check_branch
      %22 = sbr.rel (0) target = $region13
    $region12: #{tpu_custom_call.1} parent=1 // pred_region
      %23 = dma.done [#allocation3], 16
    $region13: #{tpu_custom_call.1} parent=1 // pred_fallthru
      _
    %v24 = vlaneseq
    %v25 = vshrl.u32 %v24, 7
    %s26 = smul.u32 0, 8
    %v27 = vstv %s26
    %v28 = vadd.s32 %v25, %v27
    %v29 = vcvt.s32.f32 %v28
    %v30 = vld [vmem:[#allocation2] sm:$0x1]
    %v32 = vlaneseq
    %v33 = vshrl.u32 %v32, 7
    %v34 = vsub.s32 0, %v33
    %v35 = vrot.slane %v30, %v34
    %v37 = vmul.f32 %v29, %v35
    %v38 = vld [vmem:[%s1] sm:$0x1]
    %v40 = vlaneseq
    %v41 = vshrl.u32 %v40, 7
    %v42 = vsub.s32 0, %v41
    %v43 = vrot.slane %v38, %v42
    %v45 = vadd.f32 %v37, %v43
    %v46 = vand.u32 2147483647, %v45
    %vm47 = vcmp.le.f32.partialorder %v46, 0.7853982
    %vm48 = vcmp.lt.s32.totalorder %v45, 0
    %v49 = vand.u32 %v45, 2139095040
    %v50 = vshrl.u32 %v49, 23
    %v51 = vsub.s32 %v50, 127
    %v52 = vand.u32 2147483647, %v45
    %v53 = vand.u32 %v52, 8388607
    %v54 = vor.u32 %v53, 8388608
    %v55 = vsub.s32 0, %v54
    %v56 = vadd.s32 %v51, 1
    %vm57 = vcmp.gt.s32.totalorder %v56, 0
    %v58 = vsel %vm57, %v56, 0
    %v59 = vshrl.u32 %v58, 5
    %v60 = vand.u32 %v58, 31
    %v61 = vsub.s32 32, %v60
    %v62 = vshrl.u32 683565275, %v61
    %v63 = vshll.u32 683565275, %v60
    %v64 = vshrl.u32 2475754826, %v61
    %v65 = vor.u32 %v63, %v64
    %v66 = vshll.u32 2475754826, %v60
    %v67 = vshrl.u32 2131351028, %v61
    %v68 = vor.u32 %v66, %v67
    %v69 = vshll.u32 2131351028, %v60
    %v70 = vshrl.u32 2102212464, %v61
    %v71 = vor.u32 %v69, %v70
    %v72 = vshll.u32 2102212464, %v60
    %v73 = vshrl.u32 920167782, %v61
    %v74 = vor.u32 %v72, %v73
    %v75 = vshll.u32 920167782, %v60
    %v76 = vshrl.u32 1326507024, %v61
    %v77 = vor.u32 %v75, %v76
    %vm78 = vcmp.lt.s32.totalorder %v59, 1
    %vm79 = vcmp.lt.s32.totalorder %v59, 2
    %vm80 = vcmp.lt.s32.totalorder %v59, 3
    %vm81 = vcmp.lt.s32.totalorder %v59, 4
    %v82 = vsel %vm78, %v62, %v65
    %v83 = vsel %vm81, %v71, 2102212464
    %v84 = vsel %vm80, %v68, %v83
    %v85 = vsel %vm79, %v82, %v84
    %v86 = vsel %vm78, %v65, %v68
    %v87 = vsel %vm81, %v74, 920167782
    %v88 = vsel %vm80, %v71, %v87
    %v89 = vsel %vm79, %v86, %v88
    %v90 = vsel %vm78, %v68, %v71
    %v91 = vsel %vm81, %v77, 1326507024
    %v92 = vsel %vm80, %v74, %v91
    %v93 = vsel %vm79, %v90, %v92
    %v94 = vshll.u32 %v54, 8
    %v95 = vmul.u32.u64.compose %v94, %v93
    %v96 = vextract.low.u32 %v95
    %v97 = vextract.high.u32 %v95
    %v98 = vmul.u32.u64.compose %v94, %v89
    %v99 = vextract.low.u32 %v98
    %v100 = vextract.high.u32 %v98
    %v101 = vmul.u32 %v94, %v85
    %v102 = vadd.s32 %v97, %v99
    %vm103 = vc.u32 %v97, %v99
    %v104 = vadd.s32 %v100, 1
    %v105 = vsel %vm103, %v104, %v100
    %v106 = vadd.s32 %v101, %v105
    %v107 = vadd.s32 %v106, 536870912
    %v108 = vshrl.u32 %v107, 30
    %v109 = vshll.u32 %v108, 30
    %v110 = vsub.s32 %v106, %v109
    %vm111 = vcmp.lt.s32.totalorder %v110, 0
    %v112 = vsub.s32 0, %v110
    %v113 = vsel %vm111, %v112, %v110
    %v114 = vclz %v113
    %v115 = vsub.s32 %v114, 2
    %vm116 = vcmp.gt.s32.totalorder 0, %v115
    %v117 = vsel %vm116, 0, %v115
    %v118 = vsub.s32 32, %v117
    %v119 = vshll.u32 %v110, %v117
    %v120 = vshrl.u32 %v102, %v118
    %v121 = vor.u32 %v119, %v120
    %v122 = vsub.s32 4294967266, %v117
    %v123 = vadd.s32 %v122, 127
    %v124 = vshll.u32 %v123, 23
    %v125 = vor.u32 4788187, %v124
    %v126 = vand.u32 2147483647, %v125
    %v128 = vcvt.s32.f32 %v121
    %v129 = vmul.f32 %v128, %v126
    %v130 = vxor.u32 %v129, 2147483648
    %v131 = vsel %vm48, %v130, %v129
    %v132 = vsub.s32 4, %v108
    %v133 = vsel %vm48, %v132, %v108
    %v134 = vsel %vm47, %v45, %v131
    %v135 = vsel %vm47, 0, %v133
    %v136 = vcosq.f32.pop %v134
    %v137 = vsinq.f32.pop %v134
    %vm138 = vweird.f32 %v45
    %v139 = vadd.s32 %v135, 3
    %v140 = vand.u32 %v139, 3
    %vm141 = vcmp.lt.s32.totalorder %v140, 2
    %vm142 = vcmp.eq.s32.totalorder %v140, 0
    %v143 = vxor.u32 %v137, 2147483648
    %v144 = vsel %vm142, %v136, %v143
    %vm145 = vcmp.eq.s32.totalorder %v140, 2
    %v146 = vxor.u32 %v136, 2147483648
    %v147 = vsel %vm145, %v146, %v137
    %v148 = vsel %vm141, %v144, %v147
    %v149 = vsel %vm138, nan, %v148
    %150 = vst [vmem:[#allocation5] sm:$0xff] %v149
    // Predicated region
    $region14: #{tpu_custom_call.1} parent=1 // pred_check
      _
    $region15: #{tpu_custom_call.1} parent=1 // pred_check_branch
      %152 = sbr.rel (0) target = $region17
    $region16: #{tpu_custom_call.1} parent=1 // pred_region
      %s154 = ssub.s32 128, 128
      %155 = vsyncadd [#allocation4], %s154
      %s157 = sshll.u32 [#allocation5], 4
      %s158 = int_to_ptr.vmem [resolvable:$true] %s157
      %160 = dma.vmem_to_hbm [thread:$0]  %s158, 128, %s2, [#allocation4]
    $region17: #{tpu_custom_call.1} parent=1 // pred_fallthru
      _
    // Predicated region
    $region18: #{tpu_custom_call.1} parent=1 // pred_check
      _
    $region19: #{tpu_custom_call.1} parent=1 // pred_check_branch
      %162 = sbr.rel (0) target = $region21
    $region20: #{tpu_custom_call.1} parent=1 // pred_region
      %163 = dma.done [#allocation4], 128
    $region21: #{tpu_custom_call.1} parent=1 // pred_fallthru
      _
    %164 = vsyncpa [#allocation3], 1
    %165 = vsyncpa [#allocation4], 1

</llo_original>
